<compile_context>
chip_gen: v5e
topology: v5e:2x2
jax: 0.10.0
libtpu: 0.0.40
codegen_flags: <defaults>
</compile_context>

<pallas_src>
import jax
import jax.numpy as jnp
import numpy as np
from jax.experimental import pallas as pl
from jax.experimental.pallas import tpu as pltpu


def _linear_kernel(x_ref, w_ref, b_ref, o_ref):
    # x_ref: (tm, K) VMEM, w_ref: (1, K) VMEM (lane-dense), b_ref: (1, 1) SMEM.
    # VPU elementwise multiply (sublane-broadcast of the single weight row)
    # + XLU lane reduction; bias added as a scalar broadcast. No MXU, no scratch.
    x = x_ref[...]                                   # (tm, K) f32
    w = w_ref[...]                                   # (1,  K) f32
    y = jnp.sum(x * w, axis=-1, keepdims=True)       # (tm, 1) f32
    o_ref[...] = (y + b_ref[0, 0]).astype(o_ref.dtype)


def _choose_tm(M: int, tm_max: int = 2048) -> int:
    """Balanced batch tile: multiple of 8, >= 2 grid steps for medium/large M."""
    if M <= 256:
        # Tiny batch: single grid step; this regime is fixed-overhead bound anyway.
        return M
    n_steps = max(2, -(-M // tm_max))    # >= 2 steps so both v7x cores get work
    tm = -(-M // n_steps)                # ceil(M / n_steps) -> balanced tiles
    tm = ((tm + 7) // 8) * 8             # sublane multiple
    return min(tm, M)


def linear_forward(x, w_torch, b):
    """y = x @ w_torch.T + b; x: (M, K), w_torch: (N, K) PyTorch layout (N=1), b: (N,)."""
    M, K = x.shape
    N, Kw = w_torch.shape
    assert K == Kw and N == 1

    w = w_torch.reshape(1, K)            # lane-dense weight row, no transpose
    b2 = b.reshape(1, 1).astype(jnp.float32)

    tm = _choose_tm(M)
    grid = (pl.cdiv(M, tm),)

    # VMEM budget: x block tm * roundup(K,128) * 4 B, double-buffered, plus the
    # tiny weight row and (tm, 1) output block.  tm=2048 -> ~6 MiB for x; raise
    # the scoped limit explicitly so v5e's 16 MiB default is never the binding
    # constraint.
    vmem_limit = 32 * 1024 * 1024

    return pl.pallas_call(
        _linear_kernel,
        out_shape=jax.ShapeDtypeStruct((M, N), x.dtype),
        grid_spec=pltpu.PrefetchScalarGridSpec(
            num_scalar_prefetch=0,
            grid=grid,
            in_specs=[
                pl.BlockSpec((tm, K), lambda i: (i, 0)),                      # x tile
                pl.BlockSpec((1, K), lambda i: (0, 0)),                       # weight row
                pl.BlockSpec(memory_space=pltpu.MemorySpace.SMEM),            # bias scalar
            ],
            out_specs=pl.BlockSpec((tm, N), lambda i: (i, 0)),
        ),
        compiler_params=pltpu.CompilerParams(
            dimension_semantics=("parallel",),
            vmem_limit_bytes=vmem_limit),
    )(x, w, b2)


if __name__ == "__main__":
    key = jax.random.PRNGKey(0)
    k_x, k_w, k_b = jax.random.split(key, 3)

    # Small shapes consistent with the module: batch=8, in_features=305, out=1.
    x = jax.random.normal(k_x, (8, 305), jnp.float32)
    w_torch = 0.05 * jax.random.normal(k_w, (1, 305), jnp.float32)  # nn.Linear weight (out, in)
    b = 0.05 * jax.random.normal(k_b, (1,), jnp.float32)

    y = jax.jit(linear_forward)(x, w_torch, b)
    y = jax.block_until_ready(y)

    ref = x @ w_torch.T + b
    assert y.shape == (8, 1), y.shape
    np.testing.assert_allclose(np.asarray(y), np.asarray(ref), rtol=1e-5, atol=1e-5)

    # Also exercise a larger, tiled, megacore-split batch path once.
    x_big = jax.random.normal(k_x, (1030, 305), jnp.float32)
    y_big = jax.block_until_ready(jax.jit(linear_forward)(x_big, w_torch, b))
    ref_big = x_big @ w_torch.T + b
    np.testing.assert_allclose(np.asarray(y_big), np.asarray(ref_big), rtol=1e-5, atol=1e-5)

    print("KERNEL_OK")
</pallas_src>

<mosaic_0001>
module attributes {stable_mosaic.version = 11 : i64} {
  func.func @_linear_kernel(%arg0: i32, %arg1: memref<8x305xf32, #tpu.memory_space<vmem>>, %arg2: memref<1x305xf32, #tpu.memory_space<vmem>>, %arg3: memref<1x1xf32, #tpu.memory_space<smem>>, %arg4: memref<8x1xf32, #tpu.memory_space<vmem>>) attributes {dimension_semantics = [#tpu.dimension_semantics<parallel>], iteration_bounds = array<i64: 1>, scalar_prefetch = 0 : i64, scratch_operands = 0 : i64, tpu.core_type = #tpu.core_type<tc>, window_params = [{transform_indices = @transform_0, window_bounds = array<i64: 8, 305>}, {pipeline_mode = #tpu.pipeline_mode<synchronous>, transform_indices = @transform_1, window_bounds = array<i64: 1, 305>}, {transform_indices = @transform_2, window_bounds = array<i64: 1, 1>}, {transform_indices = @transform_3, window_bounds = array<i64: 8, 1>}]} {
    %c0 = arith.constant 0 : index
    %c0_0 = arith.constant 0 : index
    %0 = vector.load %arg1[%c0, %c0_0] : memref<8x305xf32, #tpu.memory_space<vmem>>, vector<8x305xf32>
    %c0_1 = arith.constant 0 : index
    %c0_2 = arith.constant 0 : index
    %1 = vector.load %arg2[%c0_1, %c0_2] : memref<1x305xf32, #tpu.memory_space<vmem>>, vector<1x305xf32>
    %2 = vector.broadcast %1 : vector<1x305xf32> to vector<8x305xf32>
    %3 = arith.mulf %0, %2 : vector<8x305xf32>
    %cst = arith.constant dense<0.000000e+00> : vector<8xf32>
    %4 = vector.multi_reduction <add>, %3, %cst [1] : vector<8x305xf32> to vector<8xf32>
    %5 = vector.shape_cast %4 : vector<8xf32> to vector<8x1xf32>
    %c0_3 = arith.constant 0 : index
    %c0_4 = arith.constant 0 : index
    %6 = memref.load %arg3[%c0_3, %c0_4] : memref<1x1xf32, #tpu.memory_space<smem>>
    %7 = vector.broadcast %6 : f32 to vector<8x1xf32>
    %8 = arith.addf %5, %7 : vector<8x1xf32>
    %c0_5 = arith.constant 0 : index
    %c0_6 = arith.constant 0 : index
    %9 = vector.load %arg4[%c0_5, %c0_6] : memref<8x1xf32, #tpu.memory_space<vmem>>, vector<8x1xf32>
    tpu.vector_store %arg4[%c0_5, %c0_6], %8 {strides = array<i32>} : memref<8x1xf32, #tpu.memory_space<vmem>>, vector<8x1xf32>,
    return
  }
  func.func @transform_0(%arg0: i32) -> (i32, i32) {
    %c0_i32 = arith.constant 0 : i32
    %c0_i32_0 = arith.constant 0 : i32
    return %arg0, %c0_i32 : i32, i32
  }
  func.func @transform_1(%arg0: i32) -> (i32, i32) {
    %c0_i32 = arith.constant 0 : i32
    %c0_i32_0 = arith.constant 0 : i32
    %c0_i32_1 = arith.constant 0 : i32
    return %c0_i32, %c0_i32_0 : i32, i32
  }
  func.func @transform_2(%arg0: i32) -> (i32, i32) {
    %c0_i32 = arith.constant 0 : i32
    %c0_i32_0 = arith.constant 0 : i32
    %c0_i32_1 = arith.constant 0 : i32
    return %c0_i32, %c0_i32_0 : i32, i32
  }
  func.func @transform_3(%arg0: i32) -> (i32, i32) {
    %c0_i32 = arith.constant 0 : i32
    %c0_i32_0 = arith.constant 0 : i32
    return %arg0, %c0_i32 : i32, i32
  }
}

</mosaic_0001>

<llo_original>
// kernel: linear_forward.1
$region0: #{linear_forward.1}
  #allocation0 [shape = 'u32[]', space=smem, size = 0x4, offset = 0x4, fixed_abs, tag = 'smem constant byte address 0x4 - core index']
  #allocation1 [shape = 'u32[72,128]{1,0:T(1,128)}', space=vmem, size = 0x9000, scoped, tag = 'internal scratch']
  #allocation2 [shape = 'f32[1,1]{1,0:T(1,128)S(6)}', space=smem, size = 0x200, scoped, tag = 'scoped memory for linear_forward.1']
  %s0 = inlined_call_operand.hbm [shape: f32[8,305], index: 0, kind: input, shape index: {}]
  %s1 = inlined_call_operand.vmem [shape: f32[1,305], index: 1, kind: input, shape index: {}]
  %s2 = inlined_call_operand.<no memory space> [shape: f32[1,1], index: 2, kind: input, shape index: {}]
  %s3 = inlined_call_operand.vmem [shape: f32[8,1], index: 3, kind: output, shape index: {}]
  %s4 = sld [smem:[#allocation0]]
  $region26: #{linear_forward.1} parent=0
    _
  %s6 = ssub.s32 1, %s4
  %s7 = scalar_select 0, %s6, %s4
  %8 = sst [smem:[#allocation2]] %s2
  $region1: #{linear_forward.1} parent=0
    #allocation3 [shape = 'u8[12288]{0}', space=vmem, size = 0x3000, scoped, tag = 'input window, operand 0, single buffered']
    #allocation4 [shape = 's32[1]{0}', space=sflag, size = 0x4, scoped, tag = 'scoped memory for linear_forward.1']
    %9 = vsyncpa [#allocation4], 0
    // Predicated region
    $region2: #{linear_forward.1} parent=1 // pred_check
      _
    $region3: #{linear_forward.1} parent=1 // pred_check_branch
      %11 = sbr.rel (0) target = $region5
    $region4: #{linear_forward.1} parent=1 // pred_region
      %13 = vsyncadd [#allocation4], 0
      %s15 = sshll.u32 %s0, 4
      %s16 = int_to_ptr.hbm [resolvable:$true] %s15
      %s17 = sshll.u32 [#allocation3], 4
      %s18 = int_to_ptr.vmem [resolvable:$true] %s17
      %20 = dma.hbm_to_vmem [thread:$0]  %s16, 384, %s18, [#allocation4]
    $region5: #{linear_forward.1} parent=1 // pred_fallthru
      _
    // Predicated region
    $region6: #{linear_forward.1} parent=1 // pred_check
      _
    $region7: #{linear_forward.1} parent=1 // pred_check_branch
      %22 = sbr.rel (0) target = $region9
    $region8: #{linear_forward.1} parent=1 // pred_region
      _
    $region9: #{linear_forward.1} parent=1 // pred_fallthru
      _
    // Predicated region
    $region10: #{linear_forward.1} parent=1 // pred_check
      _
    $region11: #{linear_forward.1} parent=1 // pred_check_branch
      %24 = sbr.rel (0) target = $region13
    $region12: #{linear_forward.1} parent=1 // pred_region
      _
    $region13: #{linear_forward.1} parent=1 // pred_fallthru
      _
    // Predicated region
    $region14: #{linear_forward.1} parent=1 // pred_check
      _
    $region15: #{linear_forward.1} parent=1 // pred_check_branch
      %26 = sbr.rel (0) target = $region17
    $region16: #{linear_forward.1} parent=1 // pred_region
      %28 = dma.done [#allocation4], 384
    $region17: #{linear_forward.1} parent=1 // pred_fallthru
      _
    %v29 = vld [vmem:[#allocation3] sm:$0xff]
    %v30 = vld [vmem:[#allocation3 + $0x8] sm:$0xff]
    %v31 = vld [vmem:[#allocation3 + $0x10] sm:$0xff]
    %v32 = vld [vmem:[%s1] sm:$0x7]
    %v34 = vperm.slane %v32, 0
    %v35 = vperm.slane %v32, 1
    %v36 = vperm.slane %v32, 2
    %v40 = vmul.f32 %v29, %v34
    %v41 = vmul.f32 %v30, %v35
    %v42 = vmul.f32 %v31, %v36
    %v43 = vadd.f32 %v40, %v41
    %vm44 = vcmask 400384
    %v45 = vsel %vm44, %v42, 0.0
    %v46 = vadd.f32 %v43, %v45
    %47 = vadd.xlane.f32.xlu0 %v46
    %v48 = vpop.xlane.xlu0 %47
    %s49 = sld [smem:[#allocation2]]
    %v50 = vstv %s49
    %v51 = vadd.f32 %v48, %v50
    %vm52 = vcmask 7168
    %53 = vst.msk [vmem:[%s3] sm:$0xff] %vm52, %v51
    // Predicated region
    $region18: #{linear_forward.1} parent=1 // pred_check
      _
    $region19: #{linear_forward.1} parent=1 // pred_check_branch
      %55 = sbr.rel (0) target = $region21
    $region20: #{linear_forward.1} parent=1 // pred_region
      _
    $region21: #{linear_forward.1} parent=1 // pred_fallthru
      _
    // Predicated region
    $region22: #{linear_forward.1} parent=1 // pred_check
      _
    $region23: #{linear_forward.1} parent=1 // pred_check_branch
      %57 = sbr.rel (0) target = $region25
    $region24: #{linear_forward.1} parent=1 // pred_region
      _
    $region25: #{linear_forward.1} parent=1 // pred_fallthru
      _
    %58 = vsyncpa [#allocation4], 1

</llo_original>
